<compile_context>
chip_gen: v5e
topology: v5e:2x2
jax: 0.10.0
libtpu: 0.0.40
codegen_flags: <defaults>
</compile_context>

<pallas_src>
import functools

import jax
import jax.numpy as jnp
from jax.experimental import pallas as pl
from jax.experimental.pallas import tpu as pltpu


def _fused_conv_kernel(x_ref, m_ref, w_ref, b_ref, o_ref, slab_ref, *,
                       H, W, T, Cin):
    """Fused (1x1 + 3x3, padding=1) conv for one (batch, strip, cout-block).

    x_ref    : (1, Cin, H*W)      full image, resident across strip/cout axes
    m_ref    : (8, T)             per-tap 0/1 boundary masks for this strip
    w_ref    : (cout_blk, 9*Cin)  fused im2col weight, k = (kh*3+kw)*Cin + ci
    b_ref    : (cout_blk, 1)      fused bias (f32)
    o_ref    : (1, cout_blk, T)   lane-dense output strip
    slab_ref : (9*Cin, T)         VMEM scratch: the im2col slab
    """
    HW = H * W
    n_strips = HW // T
    x = x_ref[0]                                        # (Cin, HW)

    if n_strips == 1:
        x_strip = x

        def strip_slice(a):
            return a
    else:
        off = pl.multiple_of(pl.program_id(1) * T, 128)

        def strip_slice(a):
            return jax.lax.dynamic_slice_in_dim(a, off, T, axis=1)

        x_strip = strip_slice(x)

    # Build the 9 shifted taps and write each straight into the im2col slab —
    # no 9 live tap arrays, no concatenate copy, no strided slice relayouts.
    mi = 0
    for dh in (-1, 0, 1):
        for dw in (-1, 0, 1):
            tap = (dh + 1) * 3 + (dw + 1)
            shift = dh * W + dw
            if shift == 0:
                xs = x_strip
            elif dh == 0:
                # Pure column shift never crosses a whole-row strip boundary
                # for unmasked lanes -> roll within the strip (smaller XLU op;
                # the wrap positions are killed by the column masks).
                xs = pltpu.roll(x_strip, shift=(-shift) % T, axis=1)
            else:
                # Row shift needs the 1-row halo -> roll the resident full
                # image, then take this strip's lanes.
                xs = strip_slice(pltpu.roll(x, shift=(-shift) % HW, axis=1))
            if not (dh == 0 and dw == 0):
                xs = xs * m_ref[mi:mi + 1, :]           # (Cin,T) * (1,T)
                mi += 1
            slab_ref[tap * Cin:(tap + 1) * Cin, :] = xs

    # Single MXU contraction over K = 9*Cin with f32 accumulation; bias once.
    acc = jnp.dot(w_ref[...], slab_ref[...], preferred_element_type=jnp.float32)
    acc = acc + b_ref[...]
    o_ref[0] = acc.astype(o_ref.dtype)


def _default_cout_block(cout):
    """MXU-M-sized Cout block: 256 on v6e/v7x, 128 on v5e and older."""
    mxu_m = 128
    try:
        kind = jax.devices()[0].device_kind.lower()
        if ("v6" in kind) or ("v7" in kind):
            mxu_m = 256
    except Exception:
        pass
    if cout <= mxu_m:
        return cout
    return mxu_m if cout % mxu_m == 0 else cout


def add_components_forward(x_nchw, w1, b1, w2, b2, *, cout_block=None,
                           strip_rows=None, compute_dtype=None,
                           strip_vmem_budget=4 << 20):
    """out = Conv1x1(x) + Conv3x3(x, padding=1), x in NCHW (exact fold)."""
    N, Cin, H, W = x_nchw.shape
    Cout = w1.shape[1]
    HW = H * W
    out_dtype = x_nchw.dtype
    if compute_dtype is None:
        compute_dtype = x_nchw.dtype

    # --- exact trace-time fold of the two paths --------------------------
    wf = w2.astype(jnp.float32).at[1, 1].add(w1.astype(jnp.float32))
    bf = (b1.astype(jnp.float32) + b2.astype(jnp.float32)).reshape(Cout, 1)
    # im2col weight layout (Cout, 9, Cin), k = (kh*3 + kw)*Cin + ci
    w9 = jnp.transpose(wf, (3, 0, 1, 2)).reshape(Cout, 9, Cin)

    # --- pad Cin to a sublane multiple: single-matmul path always runs ----
    Cin_pad = ((Cin + 7) // 8) * 8
    x_flat = x_nchw.reshape(N, Cin, HW)            # free metadata reshape
    if Cin_pad != Cin:
        # one-time HBM pad of the channel axis (only when Cin % 8 != 0)
        x_flat = jnp.pad(x_flat, ((0, 0), (0, Cin_pad - Cin), (0, 0)))
        w9 = jnp.pad(w9, ((0, 0), (0, 0), (0, Cin_pad - Cin)))
    K = 9 * Cin_pad
    w9 = w9.reshape(Cout, K).astype(compute_dtype)
    x_flat = x_flat.astype(compute_dtype)

    # --- per-tap boundary masks, computed once in the wrapper -------------
    pos = jnp.arange(HW, dtype=jnp.int32)
    row, col = pos // W, pos % W
    bounds = {(-1, 0): row >= 1, (1, 0): row <= H - 2,
              (0, -1): col >= 1, (0, 1): col <= W - 2}
    tap_masks = []
    for dh in (-1, 0, 1):
        for dw in (-1, 0, 1):
            if dh == 0 and dw == 0:
                continue
            m = jnp.ones((HW,), jnp.bool_)
            if dh:
                m = m & bounds[(dh, 0)]
            if dw:
                m = m & bounds[(0, dw)]
            tap_masks.append(m)
    masks = jnp.stack(tap_masks).astype(compute_dtype)          # (8, HW)

    # --- Cout / spatial blocking ------------------------------------------
    if cout_block is None:
        cout_block = _default_cout_block(Cout)
    if Cout % cout_block:
        cout_block = Cout
    n_cout = Cout // cout_block

    itm = jnp.dtype(compute_dtype).itemsize
    out_itm = jnp.dtype(out_dtype).itemsize

    def _strip_bytes(rows):
        t = rows * W
        return (9 * Cin_pad * t) * itm + cout_block * t * out_itm

    if strip_rows is None:
        strip_rows = H
        if _strip_bytes(H) > strip_vmem_budget:
            cands = [d for d in range(1, H) if H % d == 0 and (d * W) % 128 == 0]
            fit = [d for d in cands if _strip_bytes(d) <= strip_vmem_budget]
            if fit:
                strip_rows = max(fit)
            elif cands:
                strip_rows = min(cands)
    if H % strip_rows:
        raise ValueError("strip_rows must divide H")
    T = strip_rows * W
    n_strips = HW // T
    if n_strips > 1 and T % 128 != 0:
        raise ValueError("multi-strip tiling requires strip_rows*W % 128 == 0")

    # --- explicit VMEM budget from the chosen block sizes ------------------
    lane = lambda v: max(v, 128)
    block_bytes = (2 * Cin_pad * lane(HW) * itm           # x (double-buffered over N)
                   + 2 * 8 * lane(T) * itm                # masks
                   + 2 * cout_block * lane(K) * itm       # weights
                   + 2 * cout_block * 128 * 4             # bias (lane-padded)
                   + 2 * cout_block * lane(T) * out_itm   # output strip
                   + 9 * Cin_pad * lane(T) * itm)         # im2col slab scratch
    vmem_limit = int(min(100 << 20, max(16 << 20, 2 * block_bytes)))

    kernel = functools.partial(_fused_conv_kernel, H=H, W=W, T=T, Cin=Cin_pad)

    out_flat = pl.pallas_call(
        kernel,
        out_shape=jax.ShapeDtypeStruct((N, Cout, HW), out_dtype),
        grid_spec=pltpu.PrefetchScalarGridSpec(
            num_scalar_prefetch=0,
            # (batch, spatial strip, cout block); x's index_map ignores the
            # strip/cout axes so the image block stays resident across them.
            grid=(N, n_strips, n_cout),
            in_specs=[
                pl.BlockSpec((1, Cin_pad, HW), lambda n, s, j: (n, 0, 0)),
                pl.BlockSpec((8, T), lambda n, s, j: (0, s)),
                pl.BlockSpec((cout_block, K), lambda n, s, j: (j, 0)),
                pl.BlockSpec((cout_block, 1), lambda n, s, j: (j, 0)),
            ],
            out_specs=pl.BlockSpec((1, cout_block, T),
                                   lambda n, s, j: (n, j, s)),
            scratch_shapes=[pltpu.VMEM((9 * Cin_pad, T), compute_dtype)],
        ),
        compiler_params=pltpu.CompilerParams(
            dimension_semantics=("parallel", "parallel", "parallel"),
            vmem_limit_bytes=vmem_limit),
    )(x_flat, masks, w9, bf)

    # Free metadata reshape back to NCHW (no transpose needed).
    return out_flat.reshape(N, Cout, H, W)


def _reference(x_nchw, w1, b1, w2, b2):
    """Pure-JAX reference (lax conv, un-fused paths) for correctness."""
    x_nhwc = jnp.transpose(x_nchw, (0, 2, 3, 1))
    y1 = jax.lax.conv_general_dilated(
        x_nhwc, w1.reshape(1, 1, *w1.shape), (1, 1), "VALID",
        dimension_numbers=("NHWC", "HWIO", "NHWC")) + b1
    y2 = jax.lax.conv_general_dilated(
        x_nhwc, w2, (1, 1), ((1, 1), (1, 1)),
        dimension_numbers=("NHWC", "HWIO", "NHWC")) + b2
    return jnp.transpose(y1 + y2, (0, 3, 1, 2))


if __name__ == "__main__":
    key = jax.random.PRNGKey(0)
    (kx, k1, k2, k3, k4,
     kx2, k5, k6, k7, k8) = jax.random.split(key, 10)

    # ---- primary (module-sized) case: N=2, Cin=4, 16x16, Cout=8, f32 ------
    N, Cin, H, W, Cout = 2, 4, 16, 16, 8
    x = jax.random.normal(kx, (N, Cin, H, W), dtype=jnp.float32)
    w1 = jax.random.normal(k1, (Cin, Cout), dtype=jnp.float32) * 0.1        # 1x1
    b1 = jax.random.normal(k2, (Cout,), dtype=jnp.float32) * 0.1
    w2 = jax.random.normal(k3, (3, 3, Cin, Cout), dtype=jnp.float32) * 0.1  # 3x3
    b2 = jax.random.normal(k4, (Cout,), dtype=jnp.float32) * 0.1

    out = jax.block_until_ready(add_components_forward(x, w1, b1, w2, b2))
    ref = _reference(x, w1, b1, w2, b2)
    assert out.shape == (N, Cout, H, W), out.shape
    assert jnp.allclose(out, ref, atol=1e-4, rtol=1e-4), "f32 mismatch vs reference"

    # ---- bf16-input path (f32 accumulation), looser tolerance -------------
    out_bf16 = jax.block_until_ready(
        add_components_forward(x, w1, b1, w2, b2, compute_dtype=jnp.bfloat16))
    assert jnp.allclose(out_bf16, ref, atol=5e-2, rtol=5e-2), "bf16 mismatch vs reference"

    # ---- multi-strip spatial tiling path (strip lanes = 8*32 = 256) -------
    N2, Cin2, H2, W2, Cout2 = 1, 8, 32, 32, 16
    x2 = jax.random.normal(kx2, (N2, Cin2, H2, W2), dtype=jnp.float32)
    w1b = jax.random.normal(k5, (Cin2, Cout2), dtype=jnp.float32) * 0.1
    b1b = jax.random.normal(k6, (Cout2,), dtype=jnp.float32) * 0.1
    w2b = jax.random.normal(k7, (3, 3, Cin2, Cout2), dtype=jnp.float32) * 0.1
    b2b = jax.random.normal(k8, (Cout2,), dtype=jnp.float32) * 0.1

    out2 = jax.block_until_ready(
        add_components_forward(x2, w1b, b1b, w2b, b2b, strip_rows=8))
    ref2 = _reference(x2, w1b, b1b, w2b, b2b)
    assert jnp.allclose(out2, ref2, atol=1e-4, rtol=1e-4), "strip mismatch vs reference"

    print("KERNEL_OK")
</pallas_src>

<mosaic_0001>
module attributes {stable_mosaic.version = 11 : i64} {
  func.func @_fused_conv_kernel(%arg0: i32, %arg1: i32, %arg2: i32, %arg3: memref<1x8x256xf32, #tpu.memory_space<vmem>>, %arg4: memref<8x256xf32, #tpu.memory_space<vmem>>, %arg5: memref<8x72xf32, #tpu.memory_space<vmem>>, %arg6: memref<8x1xf32, #tpu.memory_space<vmem>>, %arg7: memref<1x8x256xf32, #tpu.memory_space<vmem>>, %arg8: memref<72x256xf32, #tpu.memory_space<vmem>>) attributes {dimension_semantics = [#tpu.dimension_semantics<parallel>, #tpu.dimension_semantics<parallel>, #tpu.dimension_semantics<parallel>], iteration_bounds = array<i64: 2, 1, 1>, scalar_prefetch = 0 : i64, scratch_operands = 1 : i64, tpu.core_type = #tpu.core_type<tc>, window_params = [{transform_indices = @transform_0, window_bounds = array<i64: 1, 8, 256>}, {transform_indices = @transform_1, window_bounds = array<i64: 8, 256>}, {transform_indices = @transform_2, window_bounds = array<i64: 8, 72>}, {transform_indices = @transform_3, window_bounds = array<i64: 8, 1>}, {transform_indices = @transform_4, window_bounds = array<i64: 1, 8, 256>}]} {
    %c0 = arith.constant 0 : index
    %c0_0 = arith.constant 0 : index
    %c0_1 = arith.constant 0 : index
    %0 = vector.load %arg3[%c0, %c0_0, %c0_1] : memref<1x8x256xf32, #tpu.memory_space<vmem>>, vector<1x8x256xf32>
    %1 = vector.shape_cast %0 : vector<1x8x256xf32> to vector<8x256xf32>
    %c17_i32 = arith.constant 17 : i32
    %2 = tpu.dynamic_rotate %1 by %c17_i32 dim 1 : vector<8x256xf32>, i32 -> vector<8x256xf32>
    %c0_2 = arith.constant 0 : index
    %c0_3 = arith.constant 0 : index
    %3 = vector.load %arg4[%c0_2, %c0_3] : memref<8x256xf32, #tpu.memory_space<vmem>>, vector<1x256xf32>
    %4 = vector.broadcast %3 : vector<1x256xf32> to vector<8x256xf32>
    %5 = arith.mulf %2, %4 : vector<8x256xf32>
    %c0_4 = arith.constant 0 : index
    %c0_5 = arith.constant 0 : index
    %6 = vector.load %arg8[%c0_4, %c0_5] : memref<72x256xf32, #tpu.memory_space<vmem>>, vector<8x256xf32>
    tpu.vector_store %arg8[%c0_4, %c0_5], %5 {strides = array<i32>} : memref<72x256xf32, #tpu.memory_space<vmem>>, vector<8x256xf32>,
    %c16_i32 = arith.constant 16 : i32
    %7 = tpu.dynamic_rotate %1 by %c16_i32 dim 1 : vector<8x256xf32>, i32 -> vector<8x256xf32>
    %c1 = arith.constant 1 : index
    %c0_6 = arith.constant 0 : index
    %8 = vector.load %arg4[%c1, %c0_6] : memref<8x256xf32, #tpu.memory_space<vmem>>, vector<1x256xf32>
    %9 = vector.broadcast %8 : vector<1x256xf32> to vector<8x256xf32>
    %10 = arith.mulf %7, %9 : vector<8x256xf32>
    %c8 = arith.constant 8 : index
    %c0_7 = arith.constant 0 : index
    %11 = vector.load %arg8[%c8, %c0_7] : memref<72x256xf32, #tpu.memory_space<vmem>>, vector<8x256xf32>
    tpu.vector_store %arg8[%c8, %c0_7], %10 {strides = array<i32>} : memref<72x256xf32, #tpu.memory_space<vmem>>, vector<8x256xf32>,
    %c15_i32 = arith.constant 15 : i32
    %12 = tpu.dynamic_rotate %1 by %c15_i32 dim 1 : vector<8x256xf32>, i32 -> vector<8x256xf32>
    %c2 = arith.constant 2 : index
    %c0_8 = arith.constant 0 : index
    %13 = vector.load %arg4[%c2, %c0_8] : memref<8x256xf32, #tpu.memory_space<vmem>>, vector<1x256xf32>
    %14 = vector.broadcast %13 : vector<1x256xf32> to vector<8x256xf32>
    %15 = arith.mulf %12, %14 : vector<8x256xf32>
    %c16 = arith.constant 16 : index
    %c0_9 = arith.constant 0 : index
    %16 = vector.load %arg8[%c16, %c0_9] : memref<72x256xf32, #tpu.memory_space<vmem>>, vector<8x256xf32>
    tpu.vector_store %arg8[%c16, %c0_9], %15 {strides = array<i32>} : memref<72x256xf32, #tpu.memory_space<vmem>>, vector<8x256xf32>,
    %c1_i32 = arith.constant 1 : i32
    %17 = tpu.dynamic_rotate %1 by %c1_i32 dim 1 : vector<8x256xf32>, i32 -> vector<8x256xf32>
    %c3 = arith.constant 3 : index
    %c0_10 = arith.constant 0 : index
    %18 = vector.load %arg4[%c3, %c0_10] : memref<8x256xf32, #tpu.memory_space<vmem>>, vector<1x256xf32>
    %19 = vector.broadcast %18 : vector<1x256xf32> to vector<8x256xf32>
    %20 = arith.mulf %17, %19 : vector<8x256xf32>
    %c24 = arith.constant 24 : index
    %c0_11 = arith.constant 0 : index
    %21 = vector.load %arg8[%c24, %c0_11] : memref<72x256xf32, #tpu.memory_space<vmem>>, vector<8x256xf32>
    tpu.vector_store %arg8[%c24, %c0_11], %20 {strides = array<i32>} : memref<72x256xf32, #tpu.memory_space<vmem>>, vector<8x256xf32>,
    %c32 = arith.constant 32 : index
    %c0_12 = arith.constant 0 : index
    %22 = vector.load %arg8[%c32, %c0_12] : memref<72x256xf32, #tpu.memory_space<vmem>>, vector<8x256xf32>
    tpu.vector_store %arg8[%c32, %c0_12], %1 {strides = array<i32>} : memref<72x256xf32, #tpu.memory_space<vmem>>, vector<8x256xf32>,
    %c255_i32 = arith.constant 255 : i32
    %23 = tpu.dynamic_rotate %1 by %c255_i32 dim 1 : vector<8x256xf32>, i32 -> vector<8x256xf32>
    %c4 = arith.constant 4 : index
    %c0_13 = arith.constant 0 : index
    %24 = vector.load %arg4[%c4, %c0_13] : memref<8x256xf32, #tpu.memory_space<vmem>>, vector<1x256xf32>
    %25 = vector.broadcast %24 : vector<1x256xf32> to vector<8x256xf32>
    %26 = arith.mulf %23, %25 : vector<8x256xf32>
    %c40 = arith.constant 40 : index
    %c0_14 = arith.constant 0 : index
    %27 = vector.load %arg8[%c40, %c0_14] : memref<72x256xf32, #tpu.memory_space<vmem>>, vector<8x256xf32>
    tpu.vector_store %arg8[%c40, %c0_14], %26 {strides = array<i32>} : memref<72x256xf32, #tpu.memory_space<vmem>>, vector<8x256xf32>,
    %c241_i32 = arith.constant 241 : i32
    %28 = tpu.dynamic_rotate %1 by %c241_i32 dim 1 : vector<8x256xf32>, i32 -> vector<8x256xf32>
    %c5 = arith.constant 5 : index
    %c0_15 = arith.constant 0 : index
    %29 = vector.load %arg4[%c5, %c0_15] : memref<8x256xf32, #tpu.memory_space<vmem>>, vector<1x256xf32>
    %30 = vector.broadcast %29 : vector<1x256xf32> to vector<8x256xf32>
    %31 = arith.mulf %28, %30 : vector<8x256xf32>
    %c48 = arith.constant 48 : index
    %c0_16 = arith.constant 0 : index
    %32 = vector.load %arg8[%c48, %c0_16] : memref<72x256xf32, #tpu.memory_space<vmem>>, vector<8x256xf32>
    tpu.vector_store %arg8[%c48, %c0_16], %31 {strides = array<i32>} : memref<72x256xf32, #tpu.memory_space<vmem>>, vector<8x256xf32>,
    %c240_i32 = arith.constant 240 : i32
    %33 = tpu.dynamic_rotate %1 by %c240_i32 dim 1 : vector<8x256xf32>, i32 -> vector<8x256xf32>
    %c6 = arith.constant 6 : index
    %c0_17 = arith.constant 0 : index
    %34 = vector.load %arg4[%c6, %c0_17] : memref<8x256xf32, #tpu.memory_space<vmem>>, vector<1x256xf32>
    %35 = vector.broadcast %34 : vector<1x256xf32> to vector<8x256xf32>
    %36 = arith.mulf %33, %35 : vector<8x256xf32>
    %c56 = arith.constant 56 : index
    %c0_18 = arith.constant 0 : index
    %37 = vector.load %arg8[%c56, %c0_18] : memref<72x256xf32, #tpu.memory_space<vmem>>, vector<8x256xf32>
    tpu.vector_store %arg8[%c56, %c0_18], %36 {strides = array<i32>} : memref<72x256xf32, #tpu.memory_space<vmem>>, vector<8x256xf32>,
    %c239_i32 = arith.constant 239 : i32
    %38 = tpu.dynamic_rotate %1 by %c239_i32 dim 1 : vector<8x256xf32>, i32 -> vector<8x256xf32>
    %c7 = arith.constant 7 : index
    %c0_19 = arith.constant 0 : index
    %39 = vector.load %arg4[%c7, %c0_19] : memref<8x256xf32, #tpu.memory_space<vmem>>, vector<1x256xf32>
    %40 = vector.broadcast %39 : vector<1x256xf32> to vector<8x256xf32>
    %41 = arith.mulf %38, %40 : vector<8x256xf32>
    %c64 = arith.constant 64 : index
    %c0_20 = arith.constant 0 : index
    %42 = vector.load %arg8[%c64, %c0_20] : memref<72x256xf32, #tpu.memory_space<vmem>>, vector<8x256xf32>
    tpu.vector_store %arg8[%c64, %c0_20], %41 {strides = array<i32>} : memref<72x256xf32, #tpu.memory_space<vmem>>, vector<8x256xf32>,
    %c0_21 = arith.constant 0 : index
    %c0_22 = arith.constant 0 : index
    %43 = vector.load %arg5[%c0_21, %c0_22] : memref<8x72xf32, #tpu.memory_space<vmem>>, vector<8x72xf32>
    %c0_23 = arith.constant 0 : index
    %c0_24 = arith.constant 0 : index
    %44 = vector.load %arg8[%c0_23, %c0_24] : memref<72x256xf32, #tpu.memory_space<vmem>>, vector<72x256xf32>
    %cst = arith.constant dense<0.000000e+00> : vector<8x256xf32>
    %45 = tpu.matmul %43, %44, %cst {dimension_numbers = #tpu.dot_dimension_numbers<[1], [0], [0], [1], [0, 0, 1, 1], [], []>} : vector<8x72xf32>, vector<72x256xf32>, vector<8x256xf32> -> vector<8x256xf32>
    %c0_25 = arith.constant 0 : index
    %c0_26 = arith.constant 0 : index
    %46 = vector.load %arg6[%c0_25, %c0_26] : memref<8x1xf32, #tpu.memory_space<vmem>>, vector<8x1xf32>
    %47 = vector.broadcast %46 : vector<8x1xf32> to vector<8x256xf32>
    %48 = arith.addf %45, %47 : vector<8x256xf32>
    %c0_27 = arith.constant 0 : index
    %c0_28 = arith.constant 0 : index
    %c0_29 = arith.constant 0 : index
    %49 = vector.load %arg7[%c0_27, %c0_28, %c0_29] : memref<1x8x256xf32, #tpu.memory_space<vmem>>, vector<1x8x256xf32>
    %50 = vector.shape_cast %49 : vector<1x8x256xf32> to vector<8x256xf32>
    %51 = vector.shape_cast %48 : vector<8x256xf32> to vector<1x8x256xf32>
    tpu.vector_store %arg7[%c0_27, %c0_28, %c0_29], %51 {strides = array<i32>} : memref<1x8x256xf32, #tpu.memory_space<vmem>>, vector<1x8x256xf32>,
    return
  }
  func.func @transform_0(%arg0: i32, %arg1: i32, %arg2: i32) -> (i32, i32, i32) {
    %c0_i32 = arith.constant 0 : i32
    %c0_i32_0 = arith.constant 0 : i32
    %c0_i32_1 = arith.constant 0 : i32
    return %arg0, %c0_i32, %c0_i32_0 : i32, i32, i32
  }
  func.func @transform_1(%arg0: i32, %arg1: i32, %arg2: i32) -> (i32, i32) {
    %c0_i32 = arith.constant 0 : i32
    %c0_i32_0 = arith.constant 0 : i32
    return %c0_i32, %arg1 : i32, i32
  }
  func.func @transform_2(%arg0: i32, %arg1: i32, %arg2: i32) -> (i32, i32) {
    %c0_i32 = arith.constant 0 : i32
    %c0_i32_0 = arith.constant 0 : i32
    return %arg2, %c0_i32 : i32, i32
  }
  func.func @transform_3(%arg0: i32, %arg1: i32, %arg2: i32) -> (i32, i32) {
    %c0_i32 = arith.constant 0 : i32
    %c0_i32_0 = arith.constant 0 : i32
    return %arg2, %c0_i32 : i32, i32
  }
  func.func @transform_4(%arg0: i32, %arg1: i32, %arg2: i32) -> (i32, i32, i32) {
    %c0_i32 = arith.constant 0 : i32
    return %arg0, %arg2, %arg1 : i32, i32, i32
  }
}

</mosaic_0001>

<llo_original>
// kernel: tpu_custom_call.1
$region0: #{tpu_custom_call.1}
  #allocation0 [shape = 'u32[]', space=smem, size = 0x4, offset = 0x4, fixed_abs, tag = 'smem constant byte address 0x4 - core index']
  #allocation1 [shape = 'u32[72,128]{1,0:T(1,128)}', space=vmem, size = 0x9000, scoped, tag = 'internal scratch']
  #allocation2 [shape = 'f32[72,256]{1,0:T(8,128)}', space=vmem, size = 0x12000, scoped, tag = 'scratch operand']
  %s0 = inlined_call_operand.hbm [shape: f32[2,8,256], index: 0, kind: input, shape index: {}]
  %s1 = inlined_call_operand.hbm [shape: f32[8,256], index: 1, kind: input, shape index: {}]
  %s2 = inlined_call_operand.vmem [shape: f32[8,72], index: 2, kind: input, shape index: {}]
  %s3 = inlined_call_operand.vmem [shape: f32[8,1], index: 3, kind: input, shape index: {}]
  %s4 = inlined_call_operand.hbm [shape: f32[2,8,256], index: 4, kind: output, shape index: {}]
  %s5 = sld [smem:[#allocation0]]
  $region57: #{tpu_custom_call.1} parent=0
    _
  %s7 = ssub.s32 1, %s5
  %s8 = scalar_select 0, %s7, %s5
  $region1: #{tpu_custom_call.1} parent=0
    #allocation3 [shape = 'u8[16384]{0}', space=vmem, size = 0x4000, scoped, tag = 'input window, operand 0']
    #allocation4 [shape = 's32[2]{0}', space=sflag, size = 0x8, scoped, tag = 'scoped memory for tpu_custom_call.1']
    #allocation5 [shape = 's32[2]{0}', space=sflag, size = 0x8, scoped, tag = 'scoped memory for tpu_custom_call.1']
    #allocation6 [shape = 'u8[8192]{0}', space=vmem, size = 0x2000, scoped, tag = 'input window, operand 1, single buffered']
    #allocation7 [shape = 's32[1]{0}', space=sflag, size = 0x4, scoped, tag = 'scoped memory for tpu_custom_call.1']
    #allocation8 [shape = 'u8[16384]{0}', space=vmem, size = 0x4000, scoped, tag = 'output window, operand 0']
    %9 = vsyncpa [#allocation4], 0
    %s10 = scalar_lea.sflag [#allocation4], 1
    %11 = vsyncpa %s10, 0
    %12 = vsyncpa [#allocation7], 0
    %13 = vsyncpa [#allocation5], 0
    %s14 = scalar_lea.sflag [#allocation5], 1
    %15 = vsyncpa %s14, 0
    loop: start=0, step=1, limit=4
    $region2: #{tpu_custom_call.1} parent=1 // loop_pre_header
      _
    $region3: #{tpu_custom_call.1} parent=1 // loop_header
      %s17 = sphi 0, %s21
      %p18 = scmp.ge.s32.totalorder %s17, 4
      %s24 = sphi 0, %s43
      %s25 = sphi 0, %s39
      %s26 = sphi 0, %s35
      %s27 = sphi 0, %s24
      %s28 = sphi 0, %s25
      %s29 = sphi 0, %s26
      %s30 = sphi 0, %s27
      %s31 = sphi 0, %s28
      %s32 = sphi 0, %s29
      %s46 = sphi 0, %s48
      %s49 = sphi 0, %s46
      %s50 = sphi 0, %s49
      %s66 = sphi 0, %s50
      %s72 = sphi 0, %s74
      %s75 = sphi 0, %s72
      %s76 = sphi 0, %s75
      %s92 = sphi 0, %s76
      %s98 = sphi 0, %s100
      %s101 = sphi 0, %s98
      %s102 = sphi 0, %s101
      %s118 = sphi 0, %s102
      %s124 = sphi 0, %s126
      %s127 = sphi 0, %s124
      %s128 = sphi 0, %s127
      %s144 = sphi 0, %s128
      %s154 = sphi 0, %s156
      %s157 = sphi 0, %s154
      %s158 = sphi 0, %s157
      %s174 = sphi 0, %s158
    $region4: #{tpu_custom_call.1} parent=1 // loop_header_branch
      %20 = sbr.rel (%p18) target = $region8
    $region5: #{tpu_custom_call.1} parent=1 // loop_body
      %s22 = ssub.s32 %s17, 1
      %s23 = ssub.s32 %s17, 2
      %s33 = sadd.s32 1, %s26
      %p34 = scmp.ge.s32.totalorder %s33, 1
      %s35 = scalar_select %p34, 0, %s33
      %s36 = sadd.s32 1, %s25
      %s37 = scalar_select %p34, %s36, %s25
      %p38 = scmp.ge.s32.totalorder %s37, 1
      %s39 = scalar_select %p38, 0, %s37
      %s40 = sadd.s32 1, %s24
      %s41 = scalar_select %p38, %s40, %s24
      %p42 = scmp.ge.s32.totalorder %s41, 2
      %s43 = scalar_select %p42, 0, %s41
      %s44 = ssub.s32 %s24, %s43
      %p45 = scmp.eq.s32.totalorder %s44, 0
      %s47 = sadd.s32 %s46, 1
      %s48 = scalar_select %p45, %s46, %s47
      %p51 = pneg %p45
      %p52 = scmp.eq.s32.totalorder %s17, 1
      %p53 = por %p51, %p52
      %p54 = scmp.ne.s32.totalorder %s46, %s49
      %p55 = scmp.eq.s32.totalorder %s17, 0
      %p56 = por %p54, %p55
      %p57 = scmp.ne.s32.totalorder %s46, %s49
      %p58 = scmp.eq.s32.totalorder %s22, 1
      %p59 = por %p57, %p58
      %p60 = scmp.ne.s32.totalorder %s49, %s50
      %p61 = scmp.eq.s32.totalorder %s22, 0
      %p62 = por %p60, %p61
      %p63 = scmp.ne.s32.totalorder %s49, %s50
      %p64 = scmp.eq.s32.totalorder %s23, 1
      %p65 = por %p63, %p64
      %p67 = scmp.ne.s32.totalorder %s50, %s66
      %p68 = scmp.eq.s32.totalorder %s23, 0
      %p69 = por %p67, %p68
      %s70 = ssub.s32 %s25, %s39
      %p71 = scmp.eq.s32.totalorder %s70, 0
      %s73 = sadd.s32 %s72, 1
      %s74 = scalar_select %p71, %s72, %s73
      %p77 = pneg %p71
      %p78 = scmp.eq.s32.totalorder %s17, 1
      %p79 = por %p77, %p78
      %p80 = scmp.ne.s32.totalorder %s72, %s75
      %p81 = scmp.eq.s32.totalorder %s17, 0
      %p82 = por %p80, %p81
      %p83 = scmp.ne.s32.totalorder %s72, %s75
      %p84 = scmp.eq.s32.totalorder %s22, 1
      %p85 = por %p83, %p84
      %p86 = scmp.ne.s32.totalorder %s75, %s76
      %p87 = scmp.eq.s32.totalorder %s22, 0
      %p88 = por %p86, %p87
      %p89 = scmp.ne.s32.totalorder %s75, %s76
      %p90 = scmp.eq.s32.totalorder %s23, 1
      %p91 = por %p89, %p90
      %p93 = scmp.ne.s32.totalorder %s76, %s92
      %p94 = scmp.eq.s32.totalorder %s23, 0
      %p95 = por %p93, %p94
      %s96 = ssub.s32 %s26, %s35
      %p97 = scmp.eq.s32.totalorder %s96, 0
      %s99 = sadd.s32 %s98, 1
      %s100 = scalar_select %p97, %s98, %s99
      %p103 = pneg %p97
      %p104 = scmp.eq.s32.totalorder %s17, 1
      %p105 = por %p103, %p104
      %p106 = scmp.ne.s32.totalorder %s98, %s101
      %p107 = scmp.eq.s32.totalorder %s17, 0
      %p108 = por %p106, %p107
      %p109 = scmp.ne.s32.totalorder %s98, %s101
      %p110 = scmp.eq.s32.totalorder %s22, 1
      %p111 = por %p109, %p110
      %p112 = scmp.ne.s32.totalorder %s101, %s102
      %p113 = scmp.eq.s32.totalorder %s22, 0
      %p114 = por %p112, %p113
      %p115 = scmp.ne.s32.totalorder %s101, %s102
      %p116 = scmp.eq.s32.totalorder %s23, 1
      %p117 = por %p115, %p116
      %p119 = scmp.ne.s32.totalorder %s102, %s118
      %p120 = scmp.eq.s32.totalorder %s23, 0
      %p121 = por %p119, %p120
      %s122 = ssub.s32 %s26, %s35
      %p123 = scmp.eq.s32.totalorder %s122, 0
      %s125 = sadd.s32 %s124, 1
      %s126 = scalar_select %p123, %s124, %s125
      %p129 = pneg %p123
      %p130 = scmp.eq.s32.totalorder %s17, 1
      %p131 = por %p129, %p130
      %p132 = scmp.ne.s32.totalorder %s124, %s127
      %p133 = scmp.eq.s32.totalorder %s17, 0
      %p134 = por %p132, %p133
      %p135 = scmp.ne.s32.totalorder %s124, %s127
      %p136 = scmp.eq.s32.totalorder %s22, 1
      %p137 = por %p135, %p136
      %p138 = scmp.ne.s32.totalorder %s127, %s128
      %p139 = scmp.eq.s32.totalorder %s22, 0
      %p140 = por %p138, %p139
      %p141 = scmp.ne.s32.totalorder %s127, %s128
      %p142 = scmp.eq.s32.totalorder %s23, 1
      %p143 = por %p141, %p142
      %p145 = scmp.ne.s32.totalorder %s128, %s144
      %p146 = scmp.eq.s32.totalorder %s23, 0
      %p147 = por %p145, %p146
      %s148 = ssub.s32 %s24, %s43
      %s149 = ssub.s32 %s26, %s35
      %s150 = sor.u32 %s148, %s149
      %s151 = ssub.s32 %s25, %s39
      %s152 = sor.u32 %s150, %s151
      %p153 = scmp.eq.s32.totalorder %s152, 0
      %s155 = sadd.s32 %s154, 1
      %s156 = scalar_select %p153, %s154, %s155
      %p159 = pneg %p153
      %p160 = scmp.eq.s32.totalorder %s17, 1
      %p161 = por %p159, %p160
      %p162 = scmp.ne.s32.totalorder %s154, %s157
      %p163 = scmp.eq.s32.totalorder %s17, 0
      %p164 = por %p162, %p163
      %p165 = scmp.ne.s32.totalorder %s154, %s157
      %p166 = scmp.eq.s32.totalorder %s22, 1
      %p167 = por %p165, %p166
      %p168 = scmp.ne.s32.totalorder %s157, %s158
      %p169 = scmp.eq.s32.totalorder %s22, 0
      %p170 = por %p168, %p169
      %p171 = scmp.ne.s32.totalorder %s157, %s158
      %p172 = scmp.eq.s32.totalorder %s23, 1
      %p173 = por %p171, %p172
      %p175 = scmp.ne.s32.totalorder %s158, %s174
      %p176 = scmp.eq.s32.totalorder %s23, 0
      %p177 = por %p175, %p176
      %p178 = scmp.le.s32.totalorder 1, %s17
      %p179 = scmp.lt.s32.totalorder %s17, 3
      %p180 = pnand %p178, %p179
      %p181 = pneg %p180
      // Predicated region
      $region9: #{tpu_custom_call.1} parent=5 // pred_check
        _
      $region10: #{tpu_custom_call.1} parent=5 // pred_check_branch
        %183 = sbr.rel (%p180) target = $region12
      $region11: #{tpu_custom_call.1} parent=5 // pred_region
        %s184 = ssub.s32 %s17, 1
        // Predicated region
        $region13: #{tpu_custom_call.1} parent=11 // pred_check
          %p185 = pneg %p88
        $region14: #{tpu_custom_call.1} parent=11 // pred_check_branch
          %187 = sbr.rel (%p185) target = $region16
        $region15: #{tpu_custom_call.1} parent=11 // pred_region
          %s188 = smul.u32 2, %s28
          %190 = vsyncadd [#allocation7], 0
          %s191 = smul.addr %s188, 8
          %s192 = scalar_lea.hbm %s1, %s191
          %s194 = sshll.u32 %s192, 4
          %s195 = int_to_ptr.hbm [resolvable:$true] %s194
          %s196 = sshll.u32 [#allocation6], 4
          %s197 = int_to_ptr.vmem [resolvable:$true] %s196
          %199 = dma.hbm_to_vmem [thread:$0]  %s195, 256, %s197, [#allocation7]
        $region16: #{tpu_custom_call.1} parent=11 // pred_fallthru
          _
        // Predicated region
        $region17: #{tpu_custom_call.1} parent=11 // pred_check
          %p200 = pneg %p114
        $region18: #{tpu_custom_call.1} parent=11 // pred_check_branch
          %202 = sbr.rel (%p200) target = $region20
        $region19: #{tpu_custom_call.1} parent=11 // pred_region
          %p203 = scmp.lt.s32.totalorder %s29, 0
          %s204 = scalar_select %p203, %s29, 0
          %s205 = smul.addr %s204, 8
          %s206 = scalar_lea.vmem %s2, %s205
        $region20: #{tpu_custom_call.1} parent=11 // pred_fallthru
          _
        // Predicated region
        $region21: #{tpu_custom_call.1} parent=11 // pred_check
          %p207 = pneg %p140
        $region22: #{tpu_custom_call.1} parent=11 // pred_check_branch
          %209 = sbr.rel (%p207) target = $region24
        $region23: #{tpu_custom_call.1} parent=11 // pred_region
          %p210 = scmp.lt.s32.totalorder %s29, 0
          %s211 = scalar_select %p210, %s29, 0
          %s212 = smul.addr %s211, 8
          %s213 = scalar_lea.vmem %s3, %s212
        $region24: #{tpu_custom_call.1} parent=11 // pred_fallthru
          _
      $region12: #{tpu_custom_call.1} parent=5 // pred_fallthru
        _
      %p214 = scmp.lt.s32.totalorder %s17, 2
      // Predicated region
      $region25: #{tpu_custom_call.1} parent=5 // pred_check
        %p215 = pneg %p214
      $region26: #{tpu_custom_call.1} parent=5 // pred_check_branch
        %217 = sbr.rel (%p215) target = $region28
      $region27: #{tpu_custom_call.1} parent=5 // pred_region
        // Predicated region
        $region29: #{tpu_custom_call.1} parent=27 // pred_check
          %p218 = pneg %p56
        $region30: #{tpu_custom_call.1} parent=27 // pred_check_branch
          %220 = sbr.rel (%p218) target = $region32
        $region31: #{tpu_custom_call.1} parent=27 // pred_region
          %s221 = sand.u32 %s46, 1
          %s222 = scalar_lea.sflag [#allocation4], %s221
          %s223 = sand.u32 %s46, 1
          %s224 = smul.addr %s223, 16
          %s225 = scalar_lea.vmem [#allocation3], %s224
          %227 = vsyncadd %s222, 0
          %s228 = smul.addr %s24, 2
          %s229 = smul.addr %s228, 8
          %s230 = scalar_lea.hbm %s0, %s229
          %s232 = sshll.u32 %s230, 4
          %s233 = int_to_ptr.hbm [resolvable:$true] %s232
          %s234 = sshll.u32 %s225, 4
          %s235 = int_to_ptr.vmem [resolvable:$true] %s234
          %237 = dma.hbm_to_vmem [thread:$0]  %s233, 256, %s235, %s222
        $region32: #{tpu_custom_call.1} parent=27 // pred_fallthru
          _
      $region28: #{tpu_custom_call.1} parent=5 // pred_fallthru
        _
      %p238 = scmp.le.s32.totalorder 1, %s17
      %p239 = scmp.lt.s32.totalorder %s17, 3
      %p240 = pnand %p238, %p239
      %p241 = pneg %p240
      // Predicated region
      $region33: #{tpu_custom_call.1} parent=5 // pred_check
        _
      $region34: #{tpu_custom_call.1} parent=5 // pred_check_branch
        %243 = sbr.rel (%p240) target = $region36
      $region35: #{tpu_custom_call.1} parent=5 // pred_region
        %s244 = ssub.s32 %s17, 1
        %s245 = sand.u32 %s49, 1
        %s246 = scalar_lea.sflag [#allocation4], %s245
        %s247 = sand.u32 %s49, 1
        %s248 = smul.addr %s247, 16
        %s249 = scalar_lea.vmem [#allocation3], %s248
        // Predicated region
        $region37: #{tpu_custom_call.1} parent=35 // pred_check
          %p250 = pneg %p62
        $region38: #{tpu_custom_call.1} parent=35 // pred_check_branch
          %252 = sbr.rel (%p250) target = $region40
        $region39: #{tpu_custom_call.1} parent=35 // pred_region
          %254 = dma.done %s246, 256
        $region40: #{tpu_custom_call.1} parent=35 // pred_fallthru
          _
        // Predicated region
        $region41: #{tpu_custom_call.1} parent=35 // pred_check
          %p255 = pneg %p88
        $region42: #{tpu_custom_call.1} parent=35 // pred_check_branch
          %257 = sbr.rel (%p255) target = $region44
        $region43: #{tpu_custom_call.1} parent=35 // pred_region
          %259 = dma.done [#allocation7], 256
        $region44: #{tpu_custom_call.1} parent=35 // pred_fallthru
          _
        %s260 = sand.u32 %s49, 1
        %s261 = scalar_lea.sflag [#allocation4], %s260
        %s262 = sand.u32 %s49, 1
        %s263 = smul.addr %s262, 16
        %s264 = scalar_lea.vmem [#allocation3], %s263
        %p265 = pneg %p62
        %p266 = pneg %p59
        %p267 = pneg %p88
        %p268 = pneg %p85
        %p269 = scmp.lt.s32.totalorder %s29, 0
        %s270 = scalar_select %p269, %s29, 0
        %s271 = smul.addr %s270, 8
        %s272 = scalar_lea.vmem %s2, %s271
        %p273 = pneg %p114
        %p274 = pneg %p111
        %p275 = scmp.lt.s32.totalorder %s29, 0
        %s276 = scalar_select %p275, %s29, 0
        %s277 = smul.addr %s276, 8
        %s278 = scalar_lea.vmem %s3, %s277
        %p279 = pneg %p140
        %p280 = pneg %p137
        %p281 = pneg %p170
        %p282 = pneg %p167
        %s283 = sand.u32 %s157, 1
        %s284 = scalar_lea.sflag [#allocation5], %s283
        %s285 = sand.u32 %s157, 1
        %s286 = smul.addr %s285, 16
        %s287 = scalar_lea.vmem [#allocation8], %s286
        %s288 = smul.u32 2, %s28
        %p289 = scmp.lt.s32.totalorder %s29, 0
        %s290 = scalar_select %p289, %s29, 0
        %s291 = smul.addr %s290, 8
        %s292 = scalar_lea.vmem %s2, %s291
        %p293 = scmp.lt.s32.totalorder %s29, 0
        %s294 = scalar_select %p293, %s29, 0
        %s295 = smul.addr %s294, 8
        %s296 = scalar_lea.vmem %s3, %s295
        %s297 = smul.u32 2, %s28
        %v298 = vld [vmem:[%s249] sm:$0xff]
        %v299 = vld [vmem:[%s249 + $0x8] sm:$0xff]
        %300 = vrot.lane.b32.xlu0 %v298, 17
        %v301 = vpop.permute.xlu0 %300
        %302 = vrot.lane.b32.xlu0 %v299, 17
        %v303 = vpop.permute.xlu0 %302
        %v304 = vlaneseq
        %v305 = vand.u32 %v304, 127
        %vm306 = vcmp.lt.s32.totalorder %v305, 17
        %v307 = vsel %vm306, %v301, %v303
        %v308 = vsel %vm306, %v303, %v301
        %v309 = vld [vmem:[#allocation6] ss:$8 sm:$0x3]
        %v311 = vperm.slane %v309, 0
        %v312 = vperm.slane %v309, 1
        %v315 = vmul.f32 %v308, %v311
        %v316 = vmul.f32 %v307, %v312
        %317 = vst [vmem:[#allocation2] sm:$0xff] %v315
        %318 = vst [vmem:[#allocation2 + $0x8] sm:$0xff] %v316
        %319 = vrot.lane.b32.xlu0 %v298, 16
        %v320 = vpop.permute.xlu0 %319
        %321 = vrot.lane.b32.xlu0 %v299, 16
        %v322 = vpop.permute.xlu0 %321
        %vm323 = vcmp.lt.s32.totalorder %v305, 16
        %v324 = vsel %vm323, %v320, %v322
        %v325 = vsel %vm323, %v322, %v320
        %s326 = scalar_lea.vmem [#allocation6], 1
        %v327 = vld [vmem:[%s326] ss:$8 sm:$0x3]
        %v329 = vperm.slane %v327, 0
        %v330 = vperm.slane %v327, 1
        %v333 = vmul.f32 %v325, %v329
        %v334 = vmul.f32 %v324, %v330
        %335 = vst [vmem:[#allocation2 + $0x10] sm:$0xff] %v333
        %336 = vst [vmem:[#allocation2 + $0x18] sm:$0xff] %v334
        %337 = vrot.lane.b32.xlu0 %v298, 15
        %v338 = vpop.permute.xlu0 %337
        %339 = vrot.lane.b32.xlu0 %v299, 15
        %v340 = vpop.permute.xlu0 %339
        %vm341 = vcmp.lt.s32.totalorder %v305, 15
        %v342 = vsel %vm341, %v338, %v340
        %v343 = vsel %vm341, %v340, %v338
        %s344 = scalar_lea.vmem [#allocation6], 2
        %v345 = vld [vmem:[%s344] ss:$8 sm:$0x3]
        %v347 = vperm.slane %v345, 0
        %v348 = vperm.slane %v345, 1
        %v351 = vmul.f32 %v343, %v347
        %v352 = vmul.f32 %v342, %v348
        %353 = vst [vmem:[#allocation2 + $0x20] sm:$0xff] %v351
        %354 = vst [vmem:[#allocation2 + $0x28] sm:$0xff] %v352
        %355 = vrot.lane.b32.xlu0 %v298, 1
        %v356 = vpop.permute.xlu0 %355
        %357 = vrot.lane.b32.xlu0 %v299, 1
        %v358 = vpop.permute.xlu0 %357
        %vm359 = vcmp.lt.s32.totalorder %v305, 1
        %v360 = vsel %vm359, %v356, %v358
        %v361 = vsel %vm359, %v358, %v356
        %s362 = scalar_lea.vmem [#allocation6], 3
        %v363 = vld [vmem:[%s362] ss:$8 sm:$0x3]
        %v365 = vperm.slane %v363, 0
        %v366 = vperm.slane %v363, 1
        %v369 = vmul.f32 %v361, %v365
        %v370 = vmul.f32 %v360, %v366
        %371 = vst [vmem:[#allocation2 + $0x30] sm:$0xff] %v369
        %372 = vst [vmem:[#allocation2 + $0x38] sm:$0xff] %v370
        %373 = vst [vmem:[#allocation2 + $0x40] sm:$0xff] %v298
        %374 = vst [vmem:[#allocation2 + $0x48] sm:$0xff] %v299
        %375 = vrot.lane.b32.xlu0 %v298, 127
        %v376 = vpop.permute.xlu0 %375
        %377 = vrot.lane.b32.xlu0 %v299, 127
        %v378 = vpop.permute.xlu0 %377
        %vm379 = vcmp.lt.s32.totalorder %v305, 127
        %v380 = vsel %vm379, %v376, %v378
        %v381 = vsel %vm379, %v378, %v376
        %s382 = scalar_lea.vmem [#allocation6], 4
        %v383 = vld [vmem:[%s382] ss:$8 sm:$0x3]
        %v385 = vperm.slane %v383, 0
        %v386 = vperm.slane %v383, 1
        %v389 = vmul.f32 %v380, %v385
        %v390 = vmul.f32 %v381, %v386
        %391 = vst [vmem:[#allocation2 + $0x50] sm:$0xff] %v389
        %392 = vst [vmem:[#allocation2 + $0x58] sm:$0xff] %v390
        %393 = vrot.lane.b32.xlu0 %v298, 113
        %v394 = vpop.permute.xlu0 %393
        %395 = vrot.lane.b32.xlu0 %v299, 113
        %v396 = vpop.permute.xlu0 %395
        %vm397 = vcmp.lt.s32.totalorder %v305, 113
        %v398 = vsel %vm397, %v394, %v396
        %v399 = vsel %vm397, %v396, %v394
        %s400 = scalar_lea.vmem [#allocation6], 5
        %v401 = vld [vmem:[%s400] ss:$8 sm:$0x3]
        %v403 = vperm.slane %v401, 0
        %v404 = vperm.slane %v401, 1
        %v407 = vmul.f32 %v398, %v403
        %v408 = vmul.f32 %v399, %v404
        %409 = vst [vmem:[#allocation2 + $0x60] sm:$0xff] %v407
        %410 = vst [vmem:[#allocation2 + $0x68] sm:$0xff] %v408
        %411 = vrot.lane.b32.xlu0 %v298, 112
        %v412 = vpop.permute.xlu0 %411
        %413 = vrot.lane.b32.xlu0 %v299, 112
        %v414 = vpop.permute.xlu0 %413
        %vm415 = vcmp.lt.s32.totalorder %v305, 112
        %v416 = vsel %vm415, %v412, %v414
        %v417 = vsel %vm415, %v414, %v412
        %s418 = scalar_lea.vmem [#allocation6], 6
        %v419 = vld [vmem:[%s418] ss:$8 sm:$0x3]
        %v421 = vperm.slane %v419, 0
        %v422 = vperm.slane %v419, 1
        %v425 = vmul.f32 %v416, %v421
        %v426 = vmul.f32 %v417, %v422
        %427 = vst [vmem:[#allocation2 + $0x70] sm:$0xff] %v425
        %428 = vst [vmem:[#allocation2 + $0x78] sm:$0xff] %v426
        %429 = vrot.lane.b32.xlu0 %v298, 111
        %v430 = vpop.permute.xlu0 %429
        %431 = vrot.lane.b32.xlu0 %v299, 111
        %v432 = vpop.permute.xlu0 %431
        %vm433 = vcmp.lt.s32.totalorder %v305, 111
        %v434 = vsel %vm433, %v430, %v432
        %v435 = vsel %vm433, %v432, %v430
        %s436 = scalar_lea.vmem [#allocation6], 7
        %v437 = vld [vmem:[%s436] ss:$8 sm:$0x3]
        %v439 = vperm.slane %v437, 0
        %v440 = vperm.slane %v437, 1
        %v443 = vmul.f32 %v434, %v439
        %v444 = vmul.f32 %v435, %v440
        %445 = vst [vmem:[#allocation2 + $0x80] sm:$0xff] %v443
        %446 = vst [vmem:[#allocation2 + $0x88] sm:$0xff] %v444
        %v447 = vld [vmem:[%s292] sm:$0xff]
        %v448 = vld [vmem:[#allocation2] sm:$0xff]
        %v449 = vld [vmem:[#allocation2 + $0x8] sm:$0xff]
        %v450 = vld [vmem:[#allocation2 + $0x10] sm:$0xff]
        %v451 = vld [vmem:[#allocation2 + $0x18] sm:$0xff]
        %v452 = vld [vmem:[#allocation2 + $0x20] sm:$0xff]
        %v453 = vld [vmem:[#allocation2 + $0x28] sm:$0xff]
        %v454 = vld [vmem:[#allocation2 + $0x30] sm:$0xff]
        %v455 = vld [vmem:[#allocation2 + $0x38] sm:$0xff]
        %v456 = vld [vmem:[#allocation2 + $0x40] sm:$0xff]
        %v457 = vld [vmem:[#allocation2 + $0x48] sm:$0xff]
        %v458 = vld [vmem:[#allocation2 + $0x50] sm:$0xff]
        %v459 = vld [vmem:[#allocation2 + $0x58] sm:$0xff]
        %v460 = vld [vmem:[#allocation2 + $0x60] sm:$0xff]
        %v461 = vld [vmem:[#allocation2 + $0x68] sm:$0xff]
        %v462 = vld [vmem:[#allocation2 + $0x70] sm:$0xff]
        %v463 = vld [vmem:[#allocation2 + $0x78] sm:$0xff]
        %v464 = vld [vmem:[#allocation2 + $0x80] sm:$0xff]
        %v465 = vld [vmem:[#allocation2 + $0x88] sm:$0xff]
        %v466 = vld [vmem:[%s296] sm:$0xff]
        %468 = vset.pattern.permute.xlu0 0
        %469 = vperm.xlu0 %468, %v466
        %v470 = vpop.permute.xlu0 %469
        %vm472 = vcmask 588800
        %v474 = vsel %vm472, %v447, 0
        %476 = vmatpush.msra.mxu0 0.0
        %477 = vmatpush.msra.mxu0 0.0
        %478 = vmatpush.msra.mxu0 0.0
        %479 = vmatpush.msra.mxu0 0.0
        %480 = vmatpush.msra.mxu0 0.0
        %481 = vmatpush.msra.mxu0 0.0
        %482 = vmatpush.msra.mxu0 0.0
        %483 = vmatpush.msra.mxu0 %v464
        %484 = vmatpush.msra.mxu0 %v462
        %485 = vmatpush.msra.mxu0 %v460
        %486 = vmatpush.msra.mxu0 %v458
        %487 = vmatpush.msra.mxu0 %v456
        %488 = vmatpush.msra.mxu0 %v454
        %489 = vmatpush.msra.mxu0 %v452
        %490 = vmatpush.msra.mxu0 %v450
        %491 = vmatpush.msra.mxu0 %v448
        %492 = vmatmul.f32.gmra.mxu0 %v474
        %v493 = vpop.f32.mrf.mxu0
        %v494 = vadd.f32 %v470, %v493
        %495 = vdwg.mxu0
        %496 = vmatpush.msra.mxu0 0.0
        %497 = vmatpush.msra.mxu0 0.0
        %498 = vmatpush.msra.mxu0 0.0
        %499 = vmatpush.msra.mxu0 0.0
        %500 = vmatpush.msra.mxu0 0.0
        %501 = vmatpush.msra.mxu0 0.0
        %502 = vmatpush.msra.mxu0 0.0
        %503 = vmatpush.msra.mxu0 %v465
        %504 = vmatpush.msra.mxu0 %v463
        %505 = vmatpush.msra.mxu0 %v461
        %506 = vmatpush.msra.mxu0 %v459
        %507 = vmatpush.msra.mxu0 %v457
        %508 = vmatpush.msra.mxu0 %v455
        %509 = vmatpush.msra.mxu0 %v453
        %510 = vmatpush.msra.mxu0 %v451
        %511 = vmatpush.msra.mxu0 %v449
        %512 = vmatmul.f32.gmra.mxu0 %v474
        %v513 = vpop.f32.mrf.mxu0
        %v514 = vadd.f32 %v470, %v513
        %515 = vdwg.mxu0
        %516 = vst [vmem:[%s287] sm:$0xff] %v494
        %517 = vst [vmem:[%s287 + $0x8] sm:$0xff] %v514
        %s518 = sand.u32 %s157, 1
        %s519 = scalar_lea.sflag [#allocation5], %s518
        %s520 = sand.u32 %s157, 1
        %s521 = smul.addr %s520, 16
        %s522 = scalar_lea.vmem [#allocation8], %s521
        // Predicated region
        $region45: #{tpu_custom_call.1} parent=35 // pred_check
          %p523 = pneg %p167
        $region46: #{tpu_custom_call.1} parent=35 // pred_check_branch
          %525 = sbr.rel (%p523) target = $region48
        $region47: #{tpu_custom_call.1} parent=35 // pred_region
          %s526 = smul.u32 2, %s28
          %528 = vsyncadd %s519, 0
          %s529 = smul.addr %s29, 2
          %s530 = sadd.s32 %s526, %s529
          %s531 = smul.addr %s27, 2
          %s532 = sadd.s32 %s530, %s531
          %s533 = smul.addr %s532, 8
          %s534 = scalar_lea.hbm %s4, %s533
          %s536 = sshll.u32 %s522, 4
          %s537 = int_to_ptr.vmem [resolvable:$true] %s536
          %s538 = sshll.u32 %s534, 4
          %s539 = int_to_ptr.hbm [resolvable:$true] %s538
          %541 = dma.vmem_to_hbm [thread:$0]  %s537, 256, %s539, %s519
        $region48: #{tpu_custom_call.1} parent=35 // pred_fallthru
          _
      $region36: #{tpu_custom_call.1} parent=5 // pred_fallthru
        _
      %p542 = scmp.le.s32.totalorder 2, %s17
      // Predicated region
      $region49: #{tpu_custom_call.1} parent=5 // pred_check
        %p543 = pneg %p542
      $region50: #{tpu_custom_call.1} parent=5 // pred_check_branch
        %545 = sbr.rel (%p543) target = $region52
      $region51: #{tpu_custom_call.1} parent=5 // pred_region
        %s546 = ssub.s32 %s17, 2
        // Predicated region
        $region53: #{tpu_custom_call.1} parent=51 // pred_check
          %p547 = pneg %p173
        $region54: #{tpu_custom_call.1} parent=51 // pred_check_branch
          %549 = sbr.rel (%p547) target = $region56
        $region55: #{tpu_custom_call.1} parent=51 // pred_region
          %s550 = sand.u32 %s158, 1
          %s551 = scalar_lea.sflag [#allocation5], %s550
          %s552 = sand.u32 %s158, 1
          %s553 = smul.addr %s552, 16
          %s554 = scalar_lea.vmem [#allocation8], %s553
          %556 = dma.done %s551, 256
        $region56: #{tpu_custom_call.1} parent=51 // pred_fallthru
          _
      $region52: #{tpu_custom_call.1} parent=5 // pred_fallthru
        _
    $region6: #{tpu_custom_call.1} parent=1 // loop_footer
      %s21 = sadd.s32 1, %s17
    $region7: #{tpu_custom_call.1} parent=1 // loop_footer_branch
      %16 = sbr.rel target = $region3
    $region8: #{tpu_custom_call.1} parent=1 // loop_exit
      _
    %557 = vsyncpa [#allocation4], 1
    %s558 = scalar_lea.sflag [#allocation4], 1
    %559 = vsyncpa %s558, 1
    %560 = vsyncpa [#allocation7], 1
    %561 = vsyncpa [#allocation5], 1
    %s562 = scalar_lea.sflag [#allocation5], 1
    %563 = vsyncpa %s562, 1

</llo_original>
